<compile_context>
chip_gen: v7x
topology: tpu7x:2x2x1
jax: 0.10.0
libtpu: 0.0.40
codegen_flags: <defaults>
</compile_context>

<pallas_src>
import functools

import jax
import jax.numpy as jnp
from jax.experimental import pallas as pl
from jax.experimental.pallas import tpu as pltpu

GAMMA = 2.0   # fixed; applied as explicit squares below
ALPHA = 0.25
LANES = 128
MAX_ROW_TILE = 4096   # (4096, 128) f32 block = 2 MiB; 2 inputs x 2 buffers = 8 MiB


def _round_up(x, m):
    return ((x + m - 1) // m) * m


def _focal_loss_kernel(pred_ref, targ_ref, out_ref, *,
                       row_tile, steps_per_par, full_rows, rem, need_mask):
    """One (row_tile, 128) tile of stable BCE focal loss -> (8,128) partial sum."""
    p = pl.program_id(0)          # parallel slice (TensorCore on v7x)
    s = pl.program_id(1)          # sequential step within the slice
    tile = p * steps_per_par + s  # logical row-tile index (overshoot tiles get masked)

    @pl.when(s == 0)
    def _():
        out_ref[...] = jnp.zeros_like(out_ref)

    x = pred_ref[...].astype(jnp.float32)
    t = targ_ref[...].astype(jnp.float32)

    # Numerically stable sigmoid / log-sigmoid: 2 transcendentals + 1 reciprocal.
    #   e         = exp(-|x|)
    #   log_pt    = log(sigmoid(x))     = min(x, 0) - log(1 + e)
    #   log_1m_pt = log(1 - sigmoid(x)) = -max(x, 0) - log(1 + e)
    #   pt        = sigmoid(x)          = where(x >= 0, 1, e) / (1 + e)
    e = jnp.exp(-jnp.abs(x))
    log1p_e = jnp.log(1.0 + e)
    log_pt = jnp.minimum(x, 0.0) - log1p_e
    log_1m_pt = -jnp.maximum(x, 0.0) - log1p_e
    pt = jnp.where(x >= 0.0, 1.0, e) * pl.reciprocal(1.0 + e, approx=False)
    one_m_pt = 1.0 - pt

    # gamma == 2 -> explicit squares (no generic pow on the EUP).
    loss = (-ALPHA * (one_m_pt * one_m_pt) * t * log_pt
            - (1.0 - ALPHA) * (pt * pt) * (1.0 - t) * log_1m_pt)

    def accumulate(v):
        # Fold into a vreg-shaped (8, 128) partial sum: pure VPU adds per step.
        out_ref[...] += v.reshape(row_tile // 8, 8, LANES).sum(axis=0)

    if need_mask:
        # Only boundary/overshoot tiles pay for the iota/compare/select mask.
        fully_valid = (tile + 1) * row_tile <= full_rows

        @pl.when(fully_valid)
        def _():
            accumulate(loss)

        @pl.when(jnp.logical_not(fully_valid))
        def _():
            row_ids = jax.lax.broadcasted_iota(jnp.int32, (row_tile, LANES), 0)
            col_ids = jax.lax.broadcasted_iota(jnp.int32, (row_tile, LANES), 1)
            grow = tile * row_tile + row_ids   # global row id (no *128 -> no i32 overflow)
            valid = (grow < full_rows) | ((grow == full_rows) & (col_ids < rem))
            accumulate(jnp.where(valid, loss, 0.0))
    else:
        accumulate(loss)


@jax.jit
def bce_focal_loss(predict, target):
    assert predict.shape == target.shape
    n_elems = predict.size                      # static under jit
    full_rows, rem = divmod(n_elems, LANES)
    rows = full_rows + (1 if rem else 0)

    # Flatten (free for contiguous arrays).  Only pad when the element count is
    # not lane-aligned; the pad is then < 128 elements (in-kernel masking
    # removes its contribution).
    p_flat = predict.reshape(-1)
    t_flat = target.reshape(-1)
    if rem:
        p_flat = jnp.pad(p_flat, (0, LANES - rem))
        t_flat = jnp.pad(t_flat, (0, LANES - rem))
    p2 = p_flat.reshape(rows, LANES)
    t2 = t_flat.reshape(rows, LANES)

    # Sublane multiple by dtype: f32 -> 8, bf16 -> 16, int8/fp8 -> 32.
    sub = max(8, 32 // p2.dtype.itemsize, 32 // t2.dtype.itemsize)
    row_tile = min(MAX_ROW_TILE, _round_up(rows, sub))

    total_steps = pl.cdiv(rows, row_tile)
    par = 2 if total_steps >= 2 else 1          # v7x: 2 TCs; extra axis harmless on v5e/v6e
    steps_per_par = pl.cdiv(total_steps, par)
    need_mask = (par * steps_per_par * row_tile * LANES) != n_elems
    last_tile = total_steps - 1

    kernel = functools.partial(
        _focal_loss_kernel,
        row_tile=row_tile,
        steps_per_par=steps_per_par,
        full_rows=full_rows,
        rem=rem,
        need_mask=need_mask,
    )

    def in_map(p, s):
        # Clamp: any overshoot tiles (par * steps_per_par > total_steps) re-read
        # the last tile and are fully masked out in-kernel.
        return (jnp.minimum(p * steps_per_par + s, last_tile), 0)

    partials = pl.pallas_call(
        kernel,
        out_shape=jax.ShapeDtypeStruct((par, 8, LANES), jnp.float32),
        grid=(par, steps_per_par),
        in_specs=[
            pl.BlockSpec((row_tile, LANES), in_map),
            pl.BlockSpec((row_tile, LANES), in_map),
        ],
        # Per-parallel-slice (8,128) partial-sum block, resident across the
        # "arbitrary" axis (first dim squeezed out of the kernel view).
        out_specs=pl.BlockSpec((None, 8, LANES), lambda p, s: (p, 0, 0)),
        compiler_params=pltpu.CompilerParams(
            dimension_semantics=("parallel", "arbitrary"),
            vmem_limit_bytes=32 * 1024 * 1024,
        ),
    )(p2, t2)

    # Tiny final reduction + mean in the wrapper (par * 1024 floats).
    return jnp.sum(partials) * (1.0 / float(n_elems))


def _reference(predict, target):
    # Same math as the PyTorch module (naive sigmoid/log form).
    pt = jax.nn.sigmoid(predict.astype(jnp.float32))
    t = target.astype(jnp.float32)
    loss = (-ALPHA * (1.0 - pt) ** GAMMA * t * jnp.log(pt)
            - (1.0 - ALPHA) * pt ** GAMMA * (1.0 - t) * jnp.log(1.0 - pt))
    return jnp.mean(loss)


if __name__ == "__main__":
    key = jax.random.PRNGKey(0)
    k1, k2 = jax.random.split(key)
    # NCHW, small shapes: batch=2, channels=4, spatial=16x16
    predict = jax.random.normal(k1, (2, 4, 16, 16), dtype=jnp.float32)
    target = (jax.random.uniform(k2, (2, 4, 16, 16)) > 0.5).astype(jnp.float32)

    loss = bce_focal_loss(predict, target)
    jax.block_until_ready(loss)

    ref = _reference(predict, target)
    assert jnp.allclose(loss, ref, rtol=1e-5, atol=1e-6), (loss, ref)
    print("KERNEL_OK")
</pallas_src>

<mosaic_0001>
module attributes {stable_mosaic.version = 11 : i64} {
  func.func @_focal_loss_kernel(%arg0: i32, %arg1: i32, %arg2: memref<16x128xf32, #tpu.memory_space<vmem>>, %arg3: memref<16x128xf32, #tpu.memory_space<vmem>>, %arg4: memref<1x8x128xf32, #tpu.memory_space<vmem>>) attributes {dimension_semantics = [#tpu.dimension_semantics<parallel>, #tpu.dimension_semantics<arbitrary>], iteration_bounds = array<i64: 1, 1>, scalar_prefetch = 0 : i64, scratch_operands = 0 : i64, tpu.core_type = #tpu.core_type<tc>, window_params = [{transform_indices = @transform_0, window_bounds = array<i64: 16, 128>}, {transform_indices = @transform_1, window_bounds = array<i64: 16, 128>}, {transform_indices = @transform_2, window_bounds = array<i64: 1, 8, 128>}]} {
    %c0_i32 = arith.constant 0 : i32
    %0 = arith.cmpi eq, %arg1, %c0_i32 : i32
    %1 = arith.extui %0 : i1 to i32
    %c0_i32_0 = arith.constant 0 : i32
    %2 = arith.cmpi ne, %1, %c0_i32_0 : i32
    scf.if %2 {
      %cst_22 = arith.constant 0.000000e+00 : f32
      %51 = vector.broadcast %cst_22 : f32 to vector<8x128xf32>
      %c0_23 = arith.constant 0 : index
      %c0_24 = arith.constant 0 : index
      %c0_25 = arith.constant 0 : index
      %52 = vector.load %arg4[%c0_23, %c0_24, %c0_25] : memref<1x8x128xf32, #tpu.memory_space<vmem>>, vector<1x8x128xf32>
      %53 = vector.shape_cast %52 : vector<1x8x128xf32> to vector<8x128xf32>
      %54 = vector.shape_cast %51 : vector<8x128xf32> to vector<1x8x128xf32>
      tpu.vector_store %arg4[%c0_23, %c0_24, %c0_25], %54 {strides = array<i32>} : memref<1x8x128xf32, #tpu.memory_space<vmem>>, vector<1x8x128xf32>,
    } else {
    }
    %c0 = arith.constant 0 : index
    %c0_1 = arith.constant 0 : index
    %3 = vector.load %arg2[%c0, %c0_1] : memref<16x128xf32, #tpu.memory_space<vmem>>, vector<16x128xf32>
    %c0_2 = arith.constant 0 : index
    %c0_3 = arith.constant 0 : index
    %4 = vector.load %arg3[%c0_2, %c0_3] : memref<16x128xf32, #tpu.memory_space<vmem>>, vector<16x128xf32>
    %5 = math.absf %3 : vector<16x128xf32>
    %cst = arith.constant 0.000000e+00 : f32
    %6 = vector.broadcast %cst : f32 to vector<16x128xf32>
    %7 = arith.subf %6, %5 : vector<16x128xf32>
    %8 = math.exp %7 : vector<16x128xf32>
    %cst_4 = arith.constant 1.000000e+00 : f32
    %9 = vector.broadcast %cst_4 : f32 to vector<16x128xf32>
    %10 = arith.addf %9, %8 : vector<16x128xf32>
    %11 = math.log %10 : vector<16x128xf32>
    %cst_5 = arith.constant 0.000000e+00 : f32
    %12 = vector.broadcast %cst_5 : f32 to vector<16x128xf32>
    %13 = arith.minimumf %3, %12 : vector<16x128xf32>
    %14 = arith.subf %13, %11 : vector<16x128xf32>
    %cst_6 = arith.constant 0.000000e+00 : f32
    %15 = vector.broadcast %cst_6 : f32 to vector<16x128xf32>
    %16 = arith.maximumf %3, %15 : vector<16x128xf32>
    %cst_7 = arith.constant 0.000000e+00 : f32
    %17 = vector.broadcast %cst_7 : f32 to vector<16x128xf32>
    %18 = arith.subf %17, %16 : vector<16x128xf32>
    %19 = arith.subf %18, %11 : vector<16x128xf32>
    %cst_8 = arith.constant 0.000000e+00 : f32
    %20 = vector.broadcast %cst_8 : f32 to vector<16x128xf32>
    %21 = arith.cmpf oge, %3, %20 : vector<16x128xf32>
    %cst_9 = arith.constant 1.000000e+00 : f32
    %22 = vector.broadcast %cst_9 : f32 to vector<16x128xf32>
    %23 = arith.select %21, %22, %8 : vector<16x128xi1>, vector<16x128xf32>
    %cst_10 = arith.constant 1.000000e+00 : f32
    %24 = vector.broadcast %cst_10 : f32 to vector<16x128xf32>
    %25 = arith.addf %24, %8 : vector<16x128xf32>
    %26 = tpu.reciprocal %25 : vector<16x128xf32> -> vector<16x128xf32>
    %27 = arith.mulf %23, %26 : vector<16x128xf32>
    %cst_11 = arith.constant 1.000000e+00 : f32
    %28 = vector.broadcast %cst_11 : f32 to vector<16x128xf32>
    %29 = arith.subf %28, %27 : vector<16x128xf32>
    %30 = arith.mulf %29, %29 : vector<16x128xf32>
    %cst_12 = arith.constant -2.500000e-01 : f32
    %31 = vector.broadcast %cst_12 : f32 to vector<16x128xf32>
    %32 = arith.mulf %31, %30 : vector<16x128xf32>
    %33 = arith.mulf %32, %4 : vector<16x128xf32>
    %34 = arith.mulf %33, %14 : vector<16x128xf32>
    %35 = arith.mulf %27, %27 : vector<16x128xf32>
    %cst_13 = arith.constant 7.500000e-01 : f32
    %36 = vector.broadcast %cst_13 : f32 to vector<16x128xf32>
    %37 = arith.mulf %36, %35 : vector<16x128xf32>
    %cst_14 = arith.constant 1.000000e+00 : f32
    %38 = vector.broadcast %cst_14 : f32 to vector<16x128xf32>
    %39 = arith.subf %38, %4 : vector<16x128xf32>
    %40 = arith.mulf %37, %39 : vector<16x128xf32>
    %41 = arith.mulf %40, %19 : vector<16x128xf32>
    %42 = arith.subf %34, %41 : vector<16x128xf32>
    %c0_15 = arith.constant 0 : index
    %c0_16 = arith.constant 0 : index
    %c0_17 = arith.constant 0 : index
    %43 = vector.load %arg4[%c0_15, %c0_16, %c0_17] : memref<1x8x128xf32, #tpu.memory_space<vmem>>, vector<1x8x128xf32>
    %44 = vector.shape_cast %43 : vector<1x8x128xf32> to vector<8x128xf32>
    %45 = vector.shape_cast %42 : vector<16x128xf32> to vector<2x8x128xf32>
    %cst_18 = arith.constant dense<0.000000e+00> : vector<8x128xf32>
    %46 = vector.multi_reduction <add>, %45, %cst_18 [0] : vector<2x8x128xf32> to vector<8x128xf32>
    %47 = arith.addf %44, %46 : vector<8x128xf32>
    %c0_19 = arith.constant 0 : index
    %c0_20 = arith.constant 0 : index
    %c0_21 = arith.constant 0 : index
    %48 = vector.load %arg4[%c0_19, %c0_20, %c0_21] : memref<1x8x128xf32, #tpu.memory_space<vmem>>, vector<1x8x128xf32>
    %49 = vector.shape_cast %48 : vector<1x8x128xf32> to vector<8x128xf32>
    %50 = vector.shape_cast %47 : vector<8x128xf32> to vector<1x8x128xf32>
    tpu.vector_store %arg4[%c0_19, %c0_20, %c0_21], %50 {strides = array<i32>} : memref<1x8x128xf32, #tpu.memory_space<vmem>>, vector<1x8x128xf32>,
    return
  }
  func.func @transform_0(%arg0: i32, %arg1: i32) -> (i32, i32) {
    %c1_i32 = arith.constant 1 : i32
    %0 = arith.muli %arg0, %c1_i32 : i32
    %1 = arith.addi %0, %arg1 : i32
    %c0_i32 = arith.constant 0 : i32
    %2 = arith.minsi %1, %c0_i32 : i32
    %c0_i32_0 = arith.constant 0 : i32
    %c0_i32_1 = arith.constant 0 : i32
    return %2, %c0_i32_0 : i32, i32
  }
  func.func @transform_1(%arg0: i32, %arg1: i32) -> (i32, i32) {
    %c1_i32 = arith.constant 1 : i32
    %0 = arith.muli %arg0, %c1_i32 : i32
    %1 = arith.addi %0, %arg1 : i32
    %c0_i32 = arith.constant 0 : i32
    %2 = arith.minsi %1, %c0_i32 : i32
    %c0_i32_0 = arith.constant 0 : i32
    %c0_i32_1 = arith.constant 0 : i32
    return %2, %c0_i32_0 : i32, i32
  }
  func.func @transform_2(%arg0: i32, %arg1: i32) -> (i32, i32, i32) {
    %c0_i32 = arith.constant 0 : i32
    %c0_i32_0 = arith.constant 0 : i32
    %c0_i32_1 = arith.constant 0 : i32
    return %arg0, %c0_i32, %c0_i32_0 : i32, i32, i32
  }
}

</mosaic_0001>

<llo_original>
// kernel: bce_focal_loss.1
$region0: #{bce_focal_loss.1}
  #allocation0 [shape = 'u32[]', space=smem, size = 0x4, offset = 0x4, fixed_abs, tag = 'smem constant byte address 0x4 - core index']
  #allocation1 [shape = 'u32[144,128]{1,0:T(1,128)}', space=vmem, size = 0x12000, scoped, tag = 'internal scratch']
  %s0 = inlined_call_operand.vmem [shape: f32[16,128], index: 0, kind: input, shape index: {}]
  %s1 = inlined_call_operand.vmem [shape: f32[16,128], index: 1, kind: input, shape index: {}]
  %s2 = inlined_call_operand.vmem [shape: f32[1,8,128], index: 2, kind: output, shape index: {}]
  %s3 = sld [smem:[#allocation0]]
  $region22: #{bce_focal_loss.1} parent=0
    _
  %s5 = ssub.s32 1, %s3
  %s6 = scalar_select 0, %s5, %s3
  // Predicated region
  $region2: #{bce_focal_loss.1} parent=0 // pred_check
    _
  $region3: #{bce_focal_loss.1} parent=0 // pred_check_branch
    %8 = sbr.rel (0) target = $region5
  $region4: #{bce_focal_loss.1} parent=0 // pred_region
    %s9 = sadd.s32 0, 0
    %p10 = scmp.lt.s32.totalorder %s9, 0
    %s11 = scalar_select %p10, %s9, 0
    %s12 = smul.u32 2, %s11
    %p13 = scmp.lt.s32.totalorder %s12, 1
    %s14 = scalar_select %p13, %s12, 1
    %s15 = smul.addr %s14, 8
    %s16 = scalar_lea.vmem %s0, %s15
    %s17 = sadd.s32 0, 0
    %p18 = scmp.lt.s32.totalorder %s17, 0
    %s19 = scalar_select %p18, %s17, 0
    %s20 = smul.u32 2, %s19
  $region5: #{bce_focal_loss.1} parent=0 // pred_fallthru
    _
  // Predicated region
  $region6: #{bce_focal_loss.1} parent=0 // pred_check
    _
  $region7: #{bce_focal_loss.1} parent=0 // pred_check_branch
    %22 = sbr.rel (0) target = $region9
  $region8: #{bce_focal_loss.1} parent=0 // pred_region
    %s23 = sadd.s32 0, 0
    %p24 = scmp.lt.s32.totalorder %s23, 0
    %s25 = scalar_select %p24, %s23, 0
    %s26 = smul.u32 2, %s25
    %p27 = scmp.lt.s32.totalorder %s26, 1
    %s28 = scalar_select %p27, %s26, 1
    %s29 = smul.addr %s28, 8
    %s30 = scalar_lea.vmem %s1, %s29
    %s31 = sadd.s32 0, 0
    %p32 = scmp.lt.s32.totalorder %s31, 0
    %s33 = scalar_select %p32, %s31, 0
    %s34 = smul.u32 2, %s33
  $region9: #{bce_focal_loss.1} parent=0 // pred_fallthru
    _
  %s35 = sadd.s32 0, 0
  %p36 = scmp.lt.s32.totalorder %s35, 0
  %s37 = scalar_select %p36, %s35, 0
  %s38 = smul.u32 2, %s37
  %p39 = scmp.lt.s32.totalorder %s38, 1
  %s40 = scalar_select %p39, %s38, 1
  %s41 = smul.addr %s40, 8
  %s42 = scalar_lea.vmem %s0, %s41
  %s43 = sadd.s32 0, 0
  %p44 = scmp.lt.s32.totalorder %s43, 0
  %s45 = scalar_select %p44, %s43, 0
  %s46 = smul.u32 2, %s45
  %p47 = scmp.lt.s32.totalorder %s46, 1
  %s48 = scalar_select %p47, %s46, 1
  %s49 = smul.addr %s48, 8
  %s50 = scalar_lea.vmem %s1, %s49
  %s51 = sadd.s32 0, 0
  %p52 = scmp.lt.s32.totalorder %s51, 0
  %s53 = scalar_select %p52, %s51, 0
  %s54 = smul.u32 2, %s53
  %p55 = scmp.lt.s32.totalorder %s54, 1
  %s56 = scalar_select %p55, %s54, 1
  %s57 = smul.addr %s56, 8
  %s58 = scalar_lea.vmem %s0, %s57
  %s59 = sadd.s32 0, 0
  %p60 = scmp.lt.s32.totalorder %s59, 0
  %s61 = scalar_select %p60, %s59, 0
  %s62 = smul.u32 2, %s61
  %s63 = sadd.s32 0, 0
  %p64 = scmp.lt.s32.totalorder %s63, 0
  %s65 = scalar_select %p64, %s63, 0
  %s66 = smul.u32 2, %s65
  %p67 = scmp.lt.s32.totalorder %s66, 1
  %s68 = scalar_select %p67, %s66, 1
  %s69 = smul.addr %s68, 8
  %s70 = scalar_lea.vmem %s1, %s69
  %s71 = sadd.s32 0, 0
  %p72 = scmp.lt.s32.totalorder %s71, 0
  %s73 = scalar_select %p72, %s71, 0
  %s74 = smul.u32 2, %s73
  %p75 = scmp.eq.s32.totalorder 0, 0
  // Predicated region
  $region10: #{bce_focal_loss.1} parent=0 // pred_check
    %p76 = pneg %p75
  $region11: #{bce_focal_loss.1} parent=0 // pred_check_branch
    %78 = sbr.rel (%p76) target = $region13
  $region12: #{bce_focal_loss.1} parent=0 // pred_region
    %79 = vst [vmem:[%s2] sm:$0xff] 0.0
  $region13: #{bce_focal_loss.1} parent=0 // pred_fallthru
    _
  %v80 = vld [vmem:[%s58] sm:$0xff]
  %v81 = vld [vmem:[%s58 + $0x8] sm:$0xff]
  %v82 = vld [vmem:[%s70] sm:$0xff]
  %v83 = vld [vmem:[%s70 + $0x8] sm:$0xff]
  %v84 = vand.u32 2147483647, %v80
  %v85 = vand.u32 2147483647, %v81
  %v86 = vsub.f32 0.0, %v84
  %v87 = vsub.f32 0.0, %v85
  %v88 = vmul.f32 %v86, 1.442695
  %v89 = vpow.pop %v88
  %v90 = vmul.f32 %v87, 1.442695
  %v91 = vpow.pop %v90
  %v92 = vadd.f32 %v89, 1.0
  %v93 = vadd.f32 %v91, 1.0
  %v94 = vlog2.pop %v92
  %v95 = vmul.f32 %v94, 0.6931472
  %v96 = vlog2.pop %v93
  %v97 = vmul.f32 %v96, 0.6931472
  %v98 = vmin.f32 %v80, 0.0
  %v99 = vmin.f32 %v81, 0.0
  %v100 = vsub.f32 %v98, %v95
  %v101 = vsub.f32 %v99, %v97
  %v102 = vmax.f32 %v80, 0.0
  %v103 = vmax.f32 %v81, 0.0
  %v104 = vsub.f32 0.0, %v102
  %v105 = vsub.f32 0.0, %v103
  %v106 = vsub.f32 %v104, %v95
  %v107 = vsub.f32 %v105, %v97
  %vm108 = vcmp.ge.f32.partialorder %v80, 0.0
  %vm109 = vcmp.ge.f32.partialorder %v81, 0.0
  %v110 = vsel %vm108, 1.0, %v89
  %v111 = vsel %vm109, 1.0, %v91
  %v112 = vrcp.pop %v92
  %v113 = vrcp.pop %v93
  %v114 = vmul.f32 %v110, %v112
  %v115 = vmul.f32 %v111, %v113
  %v116 = vsub.f32 1.0, %v114
  %v117 = vsub.f32 1.0, %v115
  %v118 = vmul.f32 %v116, %v116
  %v119 = vmul.f32 %v117, %v117
  %v120 = vmul.f32 %v118, -0.25
  %v121 = vmul.f32 %v119, -0.25
  %v122 = vmul.f32 %v120, %v82
  %v123 = vmul.f32 %v121, %v83
  %v124 = vmul.f32 %v122, %v100
  %v125 = vmul.f32 %v123, %v101
  %v126 = vmul.f32 %v114, %v114
  %v127 = vmul.f32 %v115, %v115
  %v128 = vmul.f32 %v126, 0.75
  %v129 = vmul.f32 %v127, 0.75
  %v130 = vsub.f32 1.0, %v82
  %v131 = vsub.f32 1.0, %v83
  %v132 = vmul.f32 %v128, %v130
  %v133 = vmul.f32 %v129, %v131
  %v134 = vmul.f32 %v132, %v106
  %v135 = vmul.f32 %v133, %v107
  %v136 = vsub.f32 %v124, %v134
  %v137 = vsub.f32 %v125, %v135
  %v138 = vld [vmem:[%s2] sm:$0xff]
  %v139 = vadd.f32 %v136, %v137
  %v140 = vadd.f32 %v138, %v139
  %141 = vst [vmem:[%s2] sm:$0xff] %v140
  // Predicated region
  $region14: #{bce_focal_loss.1} parent=0 // pred_check
    _
  $region15: #{bce_focal_loss.1} parent=0 // pred_check_branch
    %143 = sbr.rel (0) target = $region17
  $region16: #{bce_focal_loss.1} parent=0 // pred_region
    _
  $region17: #{bce_focal_loss.1} parent=0 // pred_fallthru
    _
  // Predicated region
  $region18: #{bce_focal_loss.1} parent=0 // pred_check
    _
  $region19: #{bce_focal_loss.1} parent=0 // pred_check_branch
    %145 = sbr.rel (0) target = $region21
  $region20: #{bce_focal_loss.1} parent=0 // pred_region
    _
  $region21: #{bce_focal_loss.1} parent=0 // pred_fallthru
    _

</llo_original>
